<compile_context>
chip_gen: v7x
topology: tpu7x:2x2x1
jax: 0.10.0
libtpu: 0.0.40
codegen_flags: <defaults>
</compile_context>

<pallas_src>
import functools

import jax
import jax.numpy as jnp
from jax.experimental import pallas as pl
from jax.experimental.pallas import tpu as pltpu


# ----------------------------- fused Pallas kernel -----------------------------


def _simmim_fused_kernel(nb, tn, x_ref, mask_ref, pred_ref, wp_ref, bp_ref, out_ref):
    """One grid step = one block of TN flattened (batch*patch) rows.

    x_ref    : (TN, P)    bf16  unfolded patch pixels
    mask_ref : (TN, 1)    bf16  1.0 where the patch is masked
    pred_ref : (Npad, 48) f32   VMEM-resident masked-row prediction table
    wp_ref   : (P, D)     bf16  patch-embed weight (Conv2d flattened)
    bp_ref   : (1, D)     f32   patch-embed bias
    out_ref  : (1, 48)    f32   per-block partial |pred - target|_1 (lane dim kept)
    """
    # 1) patch embedding: Conv2d(k=ps, s=ps) == unfold + matmul (bf16 MXU, f32 acc).
    #    This is also the L1 reconstruction target (patch_to_emb == Identity).
    patch = (
        jnp.dot(x_ref[...], wp_ref[...], preferred_element_type=jnp.float32)
        + bp_ref[...]
    )  # (TN, D) f32

    # 2) masked-row prediction rows for this block, sliced from the resident table.
    if nb == 1:
        pred = pred_ref[...]
    else:
        j = jax.lax.rem(pl.program_id(0), nb)
        row0 = pl.multiple_of(j * tn, 8)
        pred = pred_ref[pl.ds(row0, tn), :]  # (TN, 48) f32

    # 3) mask-weighted L1, reduced over rows only (sublane reduce; no full XLU
    #    scalar reduce / splat per step — final collapse happens in the wrapper).
    diff = mask_ref[...].astype(jnp.float32) * jnp.abs(pred - patch)
    out_ref[...] = jnp.sum(diff, axis=0, keepdims=True)  # (1, 48)


# ------------------------------ glue / wrapper ------------------------------


def init_params(key, *, in_ch=3, patch_size=4, img_hw=16, encoder_dim=48):
    nh = img_hw // patch_size
    num_patches = nh * nh
    pdim = in_ch * patch_size * patch_size
    ks = jax.random.split(key, 6)
    f32 = jnp.float32
    return {
        # Conv2d(in_ch, D, k=ps, s=ps) flattened to (in_ch*ps*ps, D)
        "w_patch": (0.02 * jax.random.normal(ks[0], (pdim, encoder_dim))).astype(f32),
        "b_patch": jnp.zeros((1, encoder_dim), f32),
        "pos_embedding": (
            0.02 * jax.random.normal(ks[1], (1, num_patches, encoder_dim))
        ).astype(f32),
        "mask_token": jax.random.normal(ks[2], (encoder_dim,)).astype(f32),
        # synthetic encoder pretrain projection D -> 1
        "w_enc": (0.02 * jax.random.normal(ks[3], (1, encoder_dim))).astype(f32),
        "b_enc": jnp.zeros((1, 1), f32),
        # nn.Linear(1, 48): weight (48, 1) stored transposed as (1, 48)
        "w_pix_t": (0.02 * jax.random.normal(ks[4], (1, 48))).astype(f32),
        "b_pix": jnp.zeros((1, 48), f32),
    }


def _pick_block_n(n, cap=4096):
    """Largest multiple-of-8 divisor of n that is <= cap.

    n is always a multiple of 8 here (rows are padded), so 8 always qualifies.
    """
    for t in range(min(n, cap), 7, -1):
        if n % t == 0 and t % 8 == 0:
            return t
    return n


@functools.partial(jax.jit, static_argnames=("patch_size", "masking_ratio"))
def simmim_forward(img, params, mask_key, *, patch_size, masking_ratio=0.5):
    B, C, H, W = img.shape
    ps = patch_size
    nh, nw = H // ps, W // ps
    N = nh * nw
    P, D = params["w_patch"].shape
    out_dim = params["b_pix"].shape[-1]
    num_masked = int(masking_ratio * N)  # static (ps / ratio are static)

    # --- unfold (Conv2d k=ps s=ps == im2col + matmul); cast to bf16 BEFORE the
    #     relayout so the materialized (B, N, P) buffer is bf16. ---
    x = img.astype(jnp.bfloat16)
    x = x.reshape(B, C, nh, ps, nw, ps).transpose(0, 2, 4, 1, 3, 5).reshape(B, N, P)

    # --- random mask (torch rand().topk + scatter_), no one_hot blow-up ---
    scores = jax.random.uniform(mask_key, (B, N))
    _, masked_indices = jax.lax.top_k(scores, num_masked)  # (B, M)
    bool_mask = (
        jnp.zeros((B, N), jnp.float32)
        .at[jnp.arange(B)[:, None], masked_indices]
        .set(1.0)
    )
    mask = bool_mask.astype(jnp.bfloat16)[..., None]  # (B, N, 1), exactly {0, 1}

    # --- hoisted masked-row prediction (per-token synthetic encoder head) ---
    # masked token n: enc = (mask_token + pos[n]) . w_enc + b_enc ; pred = enc*w_pix+b
    pos = params["pos_embedding"][0]  # (N, D)
    enc_masked = (
        jnp.sum((params["mask_token"][None, :] + pos) * params["w_enc"],
                axis=-1, keepdims=True)
        + params["b_enc"]
    )  # (N, 1)
    pred_masked = (enc_masked * params["w_pix_t"] + params["b_pix"]).astype(jnp.float32)

    # --- pad N to a multiple of 8 (padded rows have mask 0 -> contribute 0) ---
    N_pad = ((N + 7) // 8) * 8
    if N_pad != N:
        padn = N_pad - N
        x = jnp.pad(x, ((0, 0), (0, padn), (0, 0)))
        mask = jnp.pad(mask, ((0, 0), (0, padn), (0, 0)))
        pred_masked = jnp.pad(pred_masked, ((0, padn), (0, 0)))

    TN = _pick_block_n(N_pad)
    NB = N_pad // TN
    G = B * NB  # single flattened, fully parallel grid axis

    x_rows = x.reshape(B * N_pad, P)          # bf16
    mask_rows = mask.reshape(B * N_pad, 1)    # bf16
    w_patch_bf16 = params["w_patch"].astype(jnp.bfloat16)

    out = pl.pallas_call(
        functools.partial(_simmim_fused_kernel, NB, TN),
        out_shape=jax.ShapeDtypeStruct((G, 1, out_dim), jnp.float32),
        grid=(G,),
        in_specs=[
            pl.BlockSpec((TN, P), lambda g: (g, 0)),            # x rows      (bf16)
            pl.BlockSpec((TN, 1), lambda g: (g, 0)),            # mask rows   (bf16)
            pl.BlockSpec((N_pad, out_dim), lambda g: (0, 0)),   # pred table, resident
            pl.BlockSpec((P, D), lambda g: (0, 0)),             # w_patch     (bf16)
            pl.BlockSpec((1, D), lambda g: (0, 0)),             # b_patch     (f32)
        ],
        out_specs=pl.BlockSpec((None, 1, out_dim), lambda g: (g, 0, 0)),
        compiler_params=pltpu.CompilerParams(
            dimension_semantics=("parallel",),
            vmem_limit_bytes=32 * 1024 * 1024,
        ),
    )(x_rows, mask_rows, pred_masked, w_patch_bf16, params["b_patch"])

    # collapse the per-block lane-wide partials to a scalar ONCE, outside the kernel
    abs_sum = jnp.sum(out)
    recon_loss = abs_sum / (B * num_masked * out_dim)  # == F.l1_loss mean reduction
    return recon_loss / num_masked


# --------------------------- pure-JAX f32 reference ---------------------------


def simmim_reference(img, params, mask_key, *, patch_size, masking_ratio=0.5):
    B, C, H, W = img.shape
    ps = patch_size
    nh, nw = H // ps, W // ps
    N = nh * nw
    num_masked = int(masking_ratio * N)

    x = img.reshape(B, C, nh, ps, nw, ps).transpose(0, 2, 4, 1, 3, 5).reshape(B, N, -1)
    patches = x @ params["w_patch"] + params["b_patch"]  # (B, N, D) — L1 target
    pos = params["pos_embedding"][0]

    scores = jax.random.uniform(mask_key, (B, N))
    _, masked_indices = jax.lax.top_k(scores, num_masked)
    bmask = (
        jnp.zeros((B, N), jnp.float32)
        .at[jnp.arange(B)[:, None], masked_indices]
        .set(1.0)
    ) > 0.5

    tokens = jnp.where(bmask[..., None],
                       params["mask_token"][None, None, :] + pos,
                       patches + pos)
    enc = jnp.sum(tokens * params["w_enc"], axis=-1, keepdims=True) + params["b_enc"]
    pred = enc * params["w_pix_t"] + params["b_pix"]  # (B, N, 48)

    br = jnp.arange(B)[:, None]
    pred_m = pred[br, masked_indices]
    target_m = patches[br, masked_indices]
    recon_loss = jnp.mean(jnp.abs(pred_m - target_m))  # F.l1_loss
    return recon_loss / num_masked


if __name__ == "__main__":
    key = jax.random.PRNGKey(0)
    k_img, k_params, k_mask = jax.random.split(key, 3)

    img = jax.random.normal(k_img, (2, 3, 16, 16), dtype=jnp.float32)
    params = init_params(k_params, in_ch=3, patch_size=4, img_hw=16, encoder_dim=48)

    loss = simmim_forward(img, params, k_mask, patch_size=4, masking_ratio=0.5)
    jax.block_until_ready(loss)

    ref = simmim_reference(img, params, k_mask, patch_size=4, masking_ratio=0.5)
    jax.block_until_ready(ref)

    assert loss.shape == () and bool(jnp.isfinite(loss))
    assert bool(jnp.allclose(loss, ref, rtol=5e-2, atol=1e-4)), (float(loss), float(ref))
    print("KERNEL_OK")
</pallas_src>

<mosaic_0001>
module attributes {stable_mosaic.version = 11 : i64} {
  func.func @_simmim_fused_kernel(%arg0: i32, %arg1: memref<16x48xbf16, #tpu.memory_space<vmem>>, %arg2: memref<16x1xbf16, #tpu.memory_space<vmem>>, %arg3: memref<16x48xf32, #tpu.memory_space<vmem>>, %arg4: memref<48x48xbf16, #tpu.memory_space<vmem>>, %arg5: memref<1x48xf32, #tpu.memory_space<vmem>>, %arg6: memref<1x1x48xf32, #tpu.memory_space<vmem>>) attributes {dimension_semantics = [#tpu.dimension_semantics<parallel>], iteration_bounds = array<i64: 2>, scalar_prefetch = 0 : i64, scratch_operands = 0 : i64, tpu.core_type = #tpu.core_type<tc>, window_params = [{transform_indices = @transform_0, window_bounds = array<i64: 16, 48>}, {transform_indices = @transform_1, window_bounds = array<i64: 16, 1>}, {pipeline_mode = #tpu.pipeline_mode<synchronous>, transform_indices = @transform_2, window_bounds = array<i64: 16, 48>}, {pipeline_mode = #tpu.pipeline_mode<synchronous>, transform_indices = @transform_3, window_bounds = array<i64: 48, 48>}, {pipeline_mode = #tpu.pipeline_mode<synchronous>, transform_indices = @transform_4, window_bounds = array<i64: 1, 48>}, {transform_indices = @transform_5, window_bounds = array<i64: 1, 1, 48>}]} {
    %c0 = arith.constant 0 : index
    %c0_0 = arith.constant 0 : index
    %0 = vector.load %arg1[%c0, %c0_0] : memref<16x48xbf16, #tpu.memory_space<vmem>>, vector<16x48xbf16>
    %c0_1 = arith.constant 0 : index
    %c0_2 = arith.constant 0 : index
    %1 = vector.load %arg4[%c0_1, %c0_2] : memref<48x48xbf16, #tpu.memory_space<vmem>>, vector<48x48xbf16>
    %cst = arith.constant dense<0.000000e+00> : vector<16x48xf32>
    %2 = tpu.matmul %0, %1, %cst {dimension_numbers = #tpu.dot_dimension_numbers<[1], [0], [0], [1], [0, 0, 1, 1], [], []>} : vector<16x48xbf16>, vector<48x48xbf16>, vector<16x48xf32> -> vector<16x48xf32>
    %c0_3 = arith.constant 0 : index
    %c0_4 = arith.constant 0 : index
    %3 = vector.load %arg5[%c0_3, %c0_4] : memref<1x48xf32, #tpu.memory_space<vmem>>, vector<1x48xf32>
    %4 = vector.broadcast %3 : vector<1x48xf32> to vector<16x48xf32>
    %5 = arith.addf %2, %4 : vector<16x48xf32>
    %c0_5 = arith.constant 0 : index
    %c0_6 = arith.constant 0 : index
    %6 = vector.load %arg3[%c0_5, %c0_6] : memref<16x48xf32, #tpu.memory_space<vmem>>, vector<16x48xf32>
    %c0_7 = arith.constant 0 : index
    %c0_8 = arith.constant 0 : index
    %7 = vector.load %arg2[%c0_7, %c0_8] : memref<16x1xbf16, #tpu.memory_space<vmem>>, vector<16x1xbf16>
    %8 = arith.extf %7 : vector<16x1xbf16> to vector<16x1xf32>
    %9 = arith.subf %6, %5 : vector<16x48xf32>
    %10 = math.absf %9 : vector<16x48xf32>
    %11 = vector.broadcast %8 : vector<16x1xf32> to vector<16x48xf32>
    %12 = arith.mulf %11, %10 : vector<16x48xf32>
    %cst_9 = arith.constant dense<0.000000e+00> : vector<48xf32>
    %13 = vector.multi_reduction <add>, %12, %cst_9 [0] : vector<16x48xf32> to vector<48xf32>
    %14 = vector.shape_cast %13 : vector<48xf32> to vector<1x48xf32>
    %c0_10 = arith.constant 0 : index
    %c0_11 = arith.constant 0 : index
    %c0_12 = arith.constant 0 : index
    %15 = vector.load %arg6[%c0_10, %c0_11, %c0_12] : memref<1x1x48xf32, #tpu.memory_space<vmem>>, vector<1x1x48xf32>
    %16 = vector.shape_cast %15 : vector<1x1x48xf32> to vector<1x48xf32>
    %17 = vector.shape_cast %14 : vector<1x48xf32> to vector<1x1x48xf32>
    tpu.vector_store %arg6[%c0_10, %c0_11, %c0_12], %17 {strides = array<i32>} : memref<1x1x48xf32, #tpu.memory_space<vmem>>, vector<1x1x48xf32>,
    return
  }
  func.func @transform_0(%arg0: i32) -> (i32, i32) {
    %c0_i32 = arith.constant 0 : i32
    %c0_i32_0 = arith.constant 0 : i32
    return %arg0, %c0_i32 : i32, i32
  }
  func.func @transform_1(%arg0: i32) -> (i32, i32) {
    %c0_i32 = arith.constant 0 : i32
    %c0_i32_0 = arith.constant 0 : i32
    return %arg0, %c0_i32 : i32, i32
  }
  func.func @transform_2(%arg0: i32) -> (i32, i32) {
    %c0_i32 = arith.constant 0 : i32
    %c0_i32_0 = arith.constant 0 : i32
    %c0_i32_1 = arith.constant 0 : i32
    return %c0_i32, %c0_i32_0 : i32, i32
  }
  func.func @transform_3(%arg0: i32) -> (i32, i32) {
    %c0_i32 = arith.constant 0 : i32
    %c0_i32_0 = arith.constant 0 : i32
    %c0_i32_1 = arith.constant 0 : i32
    return %c0_i32, %c0_i32_0 : i32, i32
  }
  func.func @transform_4(%arg0: i32) -> (i32, i32) {
    %c0_i32 = arith.constant 0 : i32
    %c0_i32_0 = arith.constant 0 : i32
    %c0_i32_1 = arith.constant 0 : i32
    return %c0_i32, %c0_i32_0 : i32, i32
  }
  func.func @transform_5(%arg0: i32) -> (i32, i32, i32) {
    %c0_i32 = arith.constant 0 : i32
    %c0_i32_0 = arith.constant 0 : i32
    %c0_i32_1 = arith.constant 0 : i32
    return %arg0, %c0_i32, %c0_i32_0 : i32, i32, i32
  }
}

</mosaic_0001>

<llo_original>
// kernel: simmim_forward.1
$region0: #{simmim_forward.1}
  #allocation0 [shape = 'u32[]', space=smem, size = 0x4, offset = 0x4, fixed_abs, tag = 'smem constant byte address 0x4 - core index']
  #allocation1 [shape = 'u32[144,128]{1,0:T(1,128)}', space=vmem, size = 0x12000, scoped, tag = 'internal scratch']
  %s0 = inlined_call_operand.vmem [shape: bf16[32,48], index: 0, kind: input, shape index: {}]
  %s1 = inlined_call_operand.vmem [shape: bf16[32,1], index: 1, kind: input, shape index: {}]
  %s2 = inlined_call_operand.vmem [shape: f32[16,48], index: 2, kind: input, shape index: {}]
  %s3 = inlined_call_operand.vmem [shape: bf16[48,48], index: 3, kind: input, shape index: {}]
  %s4 = inlined_call_operand.vmem [shape: f32[1,48], index: 4, kind: input, shape index: {}]
  %s5 = inlined_call_operand.vmem [shape: f32[2,1,48], index: 5, kind: output, shape index: {}]
  %s6 = sld [smem:[#allocation0]]
  $region53: #{simmim_forward.1} parent=0
    _
  %s8 = ssub.s32 1, %s6
  %s9 = scalar_select 0, %s8, %s6
  loop: start=0, step=1, limit=4
  $region2: #{simmim_forward.1} parent=0 // loop_pre_header
    _
  $region3: #{simmim_forward.1} parent=0 // loop_header
    %s11 = sphi 0, %s15
    %p12 = scmp.ge.s32.totalorder %s11, 4
    %s21 = sphi 0, %s23
    %s24 = sphi 0, %s21
    %s25 = sphi 0, %s24
    %s41 = sphi 0, %s25
    %s47 = sphi 0, %s49
    %s50 = sphi 0, %s47
    %s51 = sphi 0, %s50
    %s67 = sphi 0, %s51
    %s71 = sphi 0, %s71
    %s73 = sphi 0, %s71
    %s74 = sphi 0, %s73
    %s88 = sphi 0, %s74
    %s92 = sphi 0, %s92
    %s94 = sphi 0, %s92
    %s95 = sphi 0, %s94
    %s109 = sphi 0, %s95
    %s113 = sphi 0, %s113
    %s115 = sphi 0, %s113
    %s116 = sphi 0, %s115
    %s130 = sphi 0, %s116
    %s136 = sphi 0, %s138
    %s139 = sphi 0, %s136
    %s140 = sphi 0, %s139
    %s156 = sphi 0, %s140
  $region4: #{simmim_forward.1} parent=0 // loop_header_branch
    %14 = sbr.rel (%p12) target = $region8
  $region5: #{simmim_forward.1} parent=0 // loop_body
    %s16 = ssub.s32 %s11, 1
    %s17 = ssub.s32 %s11, 2
    %s18 = sadd.s32 %s11, 1
    %s19 = ssub.s32 %s11, %s18
    %p20 = scmp.eq.s32.totalorder %s19, 0
    %s22 = sadd.s32 %s21, 1
    %s23 = scalar_select %p20, %s21, %s22
    %p26 = pneg %p20
    %p27 = scmp.eq.s32.totalorder %s11, 1
    %p28 = por %p26, %p27
    %p29 = scmp.ne.s32.totalorder %s21, %s24
    %p30 = scmp.eq.s32.totalorder %s11, 0
    %p31 = por %p29, %p30
    %p32 = scmp.ne.s32.totalorder %s21, %s24
    %p33 = scmp.eq.s32.totalorder %s16, 1
    %p34 = por %p32, %p33
    %p35 = scmp.ne.s32.totalorder %s24, %s25
    %p36 = scmp.eq.s32.totalorder %s16, 0
    %p37 = por %p35, %p36
    %p38 = scmp.ne.s32.totalorder %s24, %s25
    %p39 = scmp.eq.s32.totalorder %s17, 1
    %p40 = por %p38, %p39
    %p42 = scmp.ne.s32.totalorder %s25, %s41
    %p43 = scmp.eq.s32.totalorder %s17, 0
    %p44 = por %p42, %p43
    %s45 = ssub.s32 %s11, %s18
    %p46 = scmp.eq.s32.totalorder %s45, 0
    %s48 = sadd.s32 %s47, 1
    %s49 = scalar_select %p46, %s47, %s48
    %p52 = pneg %p46
    %p53 = scmp.eq.s32.totalorder %s11, 1
    %p54 = por %p52, %p53
    %p55 = scmp.ne.s32.totalorder %s47, %s50
    %p56 = scmp.eq.s32.totalorder %s11, 0
    %p57 = por %p55, %p56
    %p58 = scmp.ne.s32.totalorder %s47, %s50
    %p59 = scmp.eq.s32.totalorder %s16, 1
    %p60 = por %p58, %p59
    %p61 = scmp.ne.s32.totalorder %s50, %s51
    %p62 = scmp.eq.s32.totalorder %s16, 0
    %p63 = por %p61, %p62
    %p64 = scmp.ne.s32.totalorder %s50, %s51
    %p65 = scmp.eq.s32.totalorder %s17, 1
    %p66 = por %p64, %p65
    %p68 = scmp.ne.s32.totalorder %s51, %s67
    %p69 = scmp.eq.s32.totalorder %s17, 0
    %p70 = por %p68, %p69
    %s72 = sadd.s32 %s71, 1
    %p75 = scmp.eq.s32.totalorder %s11, 1
    %p76 = scmp.ne.s32.totalorder %s71, %s73
    %p77 = scmp.eq.s32.totalorder %s11, 0
    %p78 = por %p76, %p77
    %p79 = scmp.ne.s32.totalorder %s71, %s73
    %p80 = scmp.eq.s32.totalorder %s16, 1
    %p81 = por %p79, %p80
    %p82 = scmp.ne.s32.totalorder %s73, %s74
    %p83 = scmp.eq.s32.totalorder %s16, 0
    %p84 = por %p82, %p83
    %p85 = scmp.ne.s32.totalorder %s73, %s74
    %p86 = scmp.eq.s32.totalorder %s17, 1
    %p87 = por %p85, %p86
    %p89 = scmp.ne.s32.totalorder %s74, %s88
    %p90 = scmp.eq.s32.totalorder %s17, 0
    %p91 = por %p89, %p90
    %s93 = sadd.s32 %s92, 1
    %p96 = scmp.eq.s32.totalorder %s11, 1
    %p97 = scmp.ne.s32.totalorder %s92, %s94
    %p98 = scmp.eq.s32.totalorder %s11, 0
    %p99 = por %p97, %p98
    %p100 = scmp.ne.s32.totalorder %s92, %s94
    %p101 = scmp.eq.s32.totalorder %s16, 1
    %p102 = por %p100, %p101
    %p103 = scmp.ne.s32.totalorder %s94, %s95
    %p104 = scmp.eq.s32.totalorder %s16, 0
    %p105 = por %p103, %p104
    %p106 = scmp.ne.s32.totalorder %s94, %s95
    %p107 = scmp.eq.s32.totalorder %s17, 1
    %p108 = por %p106, %p107
    %p110 = scmp.ne.s32.totalorder %s95, %s109
    %p111 = scmp.eq.s32.totalorder %s17, 0
    %p112 = por %p110, %p111
    %s114 = sadd.s32 %s113, 1
    %p117 = scmp.eq.s32.totalorder %s11, 1
    %p118 = scmp.ne.s32.totalorder %s113, %s115
    %p119 = scmp.eq.s32.totalorder %s11, 0
    %p120 = por %p118, %p119
    %p121 = scmp.ne.s32.totalorder %s113, %s115
    %p122 = scmp.eq.s32.totalorder %s16, 1
    %p123 = por %p121, %p122
    %p124 = scmp.ne.s32.totalorder %s115, %s116
    %p125 = scmp.eq.s32.totalorder %s16, 0
    %p126 = por %p124, %p125
    %p127 = scmp.ne.s32.totalorder %s115, %s116
    %p128 = scmp.eq.s32.totalorder %s17, 1
    %p129 = por %p127, %p128
    %p131 = scmp.ne.s32.totalorder %s116, %s130
    %p132 = scmp.eq.s32.totalorder %s17, 0
    %p133 = por %p131, %p132
    %s134 = ssub.s32 %s11, %s18
    %p135 = scmp.eq.s32.totalorder %s134, 0
    %s137 = sadd.s32 %s136, 1
    %s138 = scalar_select %p135, %s136, %s137
    %p141 = pneg %p135
    %p142 = scmp.eq.s32.totalorder %s11, 1
    %p143 = por %p141, %p142
    %p144 = scmp.ne.s32.totalorder %s136, %s139
    %p145 = scmp.eq.s32.totalorder %s11, 0
    %p146 = por %p144, %p145
    %p147 = scmp.ne.s32.totalorder %s136, %s139
    %p148 = scmp.eq.s32.totalorder %s16, 1
    %p149 = por %p147, %p148
    %p150 = scmp.ne.s32.totalorder %s139, %s140
    %p151 = scmp.eq.s32.totalorder %s16, 0
    %p152 = por %p150, %p151
    %p153 = scmp.ne.s32.totalorder %s139, %s140
    %p154 = scmp.eq.s32.totalorder %s17, 1
    %p155 = por %p153, %p154
    %p157 = scmp.ne.s32.totalorder %s140, %s156
    %p158 = scmp.eq.s32.totalorder %s17, 0
    %p159 = por %p157, %p158
    %p160 = scmp.le.s32.totalorder 1, %s11
    %p161 = scmp.lt.s32.totalorder %s11, 3
    %p162 = pnand %p160, %p161
    %p163 = pneg %p162
    // Predicated region
    $region9: #{simmim_forward.1} parent=5 // pred_check
      _
    $region10: #{simmim_forward.1} parent=5 // pred_check_branch
      %165 = sbr.rel (%p162) target = $region12
    $region11: #{simmim_forward.1} parent=5 // pred_region
      %s166 = ssub.s32 %s11, 1
      // Predicated region
      $region13: #{simmim_forward.1} parent=11 // pred_check
        %p167 = pneg %p84
      $region14: #{simmim_forward.1} parent=11 // pred_check_branch
        %169 = sbr.rel (%p167) target = $region16
      $region15: #{simmim_forward.1} parent=11 // pred_region
        _
      $region16: #{simmim_forward.1} parent=11 // pred_fallthru
        _
      // Predicated region
      $region17: #{simmim_forward.1} parent=11 // pred_check
        %p170 = pneg %p105
      $region18: #{simmim_forward.1} parent=11 // pred_check_branch
        %172 = sbr.rel (%p170) target = $region20
      $region19: #{simmim_forward.1} parent=11 // pred_region
        _
      $region20: #{simmim_forward.1} parent=11 // pred_fallthru
        _
      // Predicated region
      $region21: #{simmim_forward.1} parent=11 // pred_check
        %p173 = pneg %p126
      $region22: #{simmim_forward.1} parent=11 // pred_check_branch
        %175 = sbr.rel (%p173) target = $region24
      $region23: #{simmim_forward.1} parent=11 // pred_region
        _
      $region24: #{simmim_forward.1} parent=11 // pred_fallthru
        _
    $region12: #{simmim_forward.1} parent=5 // pred_fallthru
      _
    %p176 = scmp.lt.s32.totalorder %s11, 2
    // Predicated region
    $region25: #{simmim_forward.1} parent=5 // pred_check
      %p177 = pneg %p176
    $region26: #{simmim_forward.1} parent=5 // pred_check_branch
      %179 = sbr.rel (%p177) target = $region28
    $region27: #{simmim_forward.1} parent=5 // pred_region
      // Predicated region
      $region29: #{simmim_forward.1} parent=27 // pred_check
        %p180 = pneg %p31
      $region30: #{simmim_forward.1} parent=27 // pred_check_branch
        %182 = sbr.rel (%p180) target = $region32
      $region31: #{simmim_forward.1} parent=27 // pred_region
        %s183 = smul.u32 2, %s11
        %p184 = scmp.lt.s32.totalorder %s183, 3
        %s185 = scalar_select %p184, %s183, 3
        %s186 = smul.addr %s185, 4
        %s187 = scalar_lea.vmem %s0, %s186
        %s188 = smul.u32 2, %s11
      $region32: #{simmim_forward.1} parent=27 // pred_fallthru
        _
      // Predicated region
      $region33: #{simmim_forward.1} parent=27 // pred_check
        %p189 = pneg %p57
      $region34: #{simmim_forward.1} parent=27 // pred_check_branch
        %191 = sbr.rel (%p189) target = $region36
      $region35: #{simmim_forward.1} parent=27 // pred_region
        %s192 = smul.u32 2, %s11
        %p193 = scmp.lt.s32.totalorder %s192, 3
        %s194 = scalar_select %p193, %s192, 3
        %s195 = smul.addr %s194, 4
        %s196 = scalar_lea.vmem %s1, %s195
        %s197 = smul.u32 2, %s11
      $region36: #{simmim_forward.1} parent=27 // pred_fallthru
        _
    $region28: #{simmim_forward.1} parent=5 // pred_fallthru
      _
    %p198 = scmp.le.s32.totalorder 1, %s11
    %p199 = scmp.lt.s32.totalorder %s11, 3
    %p200 = pnand %p198, %p199
    %p201 = pneg %p200
    // Predicated region
    $region37: #{simmim_forward.1} parent=5 // pred_check
      _
    $region38: #{simmim_forward.1} parent=5 // pred_check_branch
      %203 = sbr.rel (%p200) target = $region40
    $region39: #{simmim_forward.1} parent=5 // pred_region
      %s204 = ssub.s32 %s11, 1
      %s205 = smul.u32 2, %s16
      %p206 = scmp.lt.s32.totalorder %s205, 3
      %s207 = scalar_select %p206, %s205, 3
      %s208 = smul.addr %s207, 4
      %s209 = scalar_lea.vmem %s0, %s208
      %p210 = pneg %p37
      %p211 = pneg %p34
      %s212 = smul.u32 2, %s16
      %p213 = scmp.lt.s32.totalorder %s212, 3
      %s214 = scalar_select %p213, %s212, 3
      %s215 = smul.addr %s214, 4
      %s216 = scalar_lea.vmem %s1, %s215
      %p217 = pneg %p63
      %p218 = pneg %p60
      %p219 = pneg %p84
      %p220 = pneg %p81
      %p221 = pneg %p105
      %p222 = pneg %p102
      %p223 = pneg %p126
      %p224 = pneg %p123
      %p225 = pneg %p152
      %p226 = pneg %p149
      %p227 = scmp.lt.s32.totalorder %s16, 1
      %s228 = scalar_select %p227, %s16, 1
      %s229 = scalar_lea.vmem %s5, %s228
      %s230 = smul.u32 2, %s16
      %p231 = scmp.lt.s32.totalorder %s230, 3
      %s232 = scalar_select %p231, %s230, 3
      %s233 = smul.addr %s232, 4
      %s234 = scalar_lea.vmem %s0, %s233
      %s235 = smul.u32 2, %s16
      %s236 = smul.u32 2, %s16
      %p237 = scmp.lt.s32.totalorder %s236, 3
      %s238 = scalar_select %p237, %s236, 3
      %s239 = smul.addr %s238, 4
      %s240 = scalar_lea.vmem %s1, %s239
      %s241 = smul.u32 2, %s16
      %p242 = scmp.lt.s32.totalorder %s16, 1
      %s243 = scalar_select %p242, %s16, 1
      %s244 = scalar_lea.vmem %s5, %s243
      %v246 = vld [vmem:[%s234] sm:$0xf]
      %v247 = vld [vmem:[%s234 + $0x4] sm:$0xf]
      %v248 = vld [vmem:[%s3] sm:$0xf]
      %v249 = vld [vmem:[%s3 + $0x4] sm:$0xf]
      %v250 = vld [vmem:[%s3 + $0x8] sm:$0xf]
      %v251 = vld [vmem:[%s3 + $0xc] sm:$0xf]
      %v252 = vld [vmem:[%s3 + $0x10] sm:$0xf]
      %v253 = vld [vmem:[%s3 + $0x14] sm:$0xf]
      %v254 = vld [vmem:[%s4] sm:$0x1]
      %v256 = vlaneseq
      %v257 = vshrl.u32 %v256, 7
      %v258 = vsub.s32 0, %v257
      %v259 = vrot.slane %v254, %v258
      %v263 = vunpack.c.l.b16 %v246
      %v264 = vunpack.c.l.b16 %v247
      %v265 = vpack.c.b16 %v264, %v263
      %v272 = vunpack.c.l.b16 %v248
      %v273 = vunpack.c.l.b16 %v249
      %v274 = vunpack.c.l.b16 %v250
      %v275 = vunpack.c.l.b16 %v251
      %v276 = vunpack.c.l.b16 %v252
      %v277 = vunpack.c.l.b16 %v253
      %v278 = vpack.c.b16 %v273, %v272
      %v279 = vpack.c.b16 %v275, %v274
      %v280 = vpack.c.b16 %v277, %v276
      %vm284 = vcmask 392192
      %v286 = vsel %vm284, %v265, 0
      %288 = vmatprep.subr.bf16.mxu0 0
      %289 = vmatpush1.bf16.msra.mxu0 %v278
      %290 = vmatprep.subr.bf16.mxu0 0
      %291 = vmatpush1.bf16.msra.mxu0 %v279
      %292 = vmatprep.subr.bf16.mxu0 0
      %293 = vmatpush1.bf16.msra.mxu0 %v280
      %294 = vmatprep.subr.bf16.mxu0 0
      %295 = vmatpush1.bf16.msra.mxu0 0
      %296 = vmatprep.subr.bf16.mxu0 0
      %297 = vmatpush1.bf16.msra.mxu0 0
      %298 = vmatprep.subr.bf16.mxu0 0
      %299 = vmatpush1.bf16.msra.mxu0 0
      %300 = vmatprep.subr.bf16.mxu0 0
      %301 = vmatpush1.bf16.msra.mxu0 0
      %302 = vmatprep.subr.bf16.mxu0 0
      %303 = vmatpush1.bf16.msra.mxu0 0
      %304 = vmatprep.subr.bf16.mxu0 0
      %305 = vmatpush1.bf16.msra.mxu0 0
      %306 = vmatprep.subr.bf16.mxu0 0
      %307 = vmatpush1.bf16.msra.mxu0 0
      %308 = vmatprep.subr.bf16.mxu0 0
      %309 = vmatpush1.bf16.msra.mxu0 0
      %310 = vmatprep.subr.bf16.mxu0 0
      %311 = vmatpush1.bf16.msra.mxu0 0
      %312 = vmatprep.subr.bf16.mxu0 0
      %313 = vmatpush1.bf16.msra.mxu0 0
      %314 = vmatprep.subr.bf16.mxu0 0
      %315 = vmatpush1.bf16.msra.mxu0 0
      %316 = vmatprep.subr.bf16.mxu0 0
      %317 = vmatpush1.bf16.msra.mxu0 0
      %318 = vmatprep.subr.bf16.mxu0 0
      %319 = vmatpush1.bf16.msra.mxu0 0
      %320 = vmatprep.mubr.bf16.mxu0 0
      %321 = vmatmul.mubr.bf16.gmra.mrb[0].mxu0 %v286
      %v322 = vpop.f32.mrb[0].mxu0
      %v323 = vadd.f32 %v259, %v322
      %v324 = vpop.f32.mrb[0].mxu0
      %v325 = vpop.f32.mrb[0].mxu0
      %v326 = vadd.f32 %v259, %v325
      %v327 = vpop.f32.mrb[0].mxu0
      %328 = vdwg.mxu0
      %v329 = vld [vmem:[%s2] sm:$0xff]
      %v330 = vld [vmem:[%s2 + $0x8] sm:$0xff]
      %v331 = vld [vmem:[%s240] sm:$0xf]
      %v332 = vld [vmem:[%s240 + $0x4] sm:$0xf]
      %v333 = vunpack.c.l.bf16 %v331
      %v334 = vunpack.c.l.bf16 %v332
      %v335 = vsub.f32 %v329, %v323
      %v336 = vsub.f32 %v330, %v326
      %v337 = vand.u32 2147483647, %v335
      %v338 = vand.u32 2147483647, %v336
      %340 = vset.pattern.permute.xlu0 0
      %341 = vperm.xlu0 %340, %v333
      %v342 = vpop.permute.xlu0 %341
      %345 = vset.pattern.permute.xlu0 0
      %346 = vperm.xlu0 %345, %v334
      %v347 = vpop.permute.xlu0 %346
      %v349 = vmul.f32 %v342, %v337
      %v350 = vmul.f32 %v347, %v338
      %v351 = vsel %vm284, %v349, 0.0
      %v352 = vsel %vm284, %v350, 0.0
      %v353 = vadd.f32 %v351, %v352
      %v354 = vrot.slane %v353, 4
      %v355 = vadd.f32 %v353, %v354
      %v356 = vrot.slane %v355, 2
      %v357 = vadd.f32 %v355, %v356
      %v358 = vrot.slane %v357, 1
      %v359 = vadd.f32 %v357, %v358
      %vm360 = vcmask 385024
      %361 = vst.msk [vmem:[%s244] sm:$0x1] %vm360, %v359
      %p362 = scmp.lt.s32.totalorder %s16, 1
      %s363 = scalar_select %p362, %s16, 1
      %s364 = scalar_lea.vmem %s5, %s363
      // Predicated region
      $region41: #{simmim_forward.1} parent=39 // pred_check
        %p365 = pneg %p149
      $region42: #{simmim_forward.1} parent=39 // pred_check_branch
        %367 = sbr.rel (%p365) target = $region44
      $region43: #{simmim_forward.1} parent=39 // pred_region
        _
      $region44: #{simmim_forward.1} parent=39 // pred_fallthru
        _
    $region40: #{simmim_forward.1} parent=5 // pred_fallthru
      _
    %p368 = scmp.le.s32.totalorder 2, %s11
    // Predicated region
    $region45: #{simmim_forward.1} parent=5 // pred_check
      %p369 = pneg %p368
    $region46: #{simmim_forward.1} parent=5 // pred_check_branch
      %371 = sbr.rel (%p369) target = $region48
    $region47: #{simmim_forward.1} parent=5 // pred_region
      %s372 = ssub.s32 %s11, 2
      // Predicated region
      $region49: #{simmim_forward.1} parent=47 // pred_check
        %p373 = pneg %p155
      $region50: #{simmim_forward.1} parent=47 // pred_check_branch
        %375 = sbr.rel (%p373) target = $region52
      $region51: #{simmim_forward.1} parent=47 // pred_region
        %p376 = scmp.lt.s32.totalorder %s17, 1
        %s377 = scalar_select %p376, %s17, 1
        %s378 = scalar_lea.vmem %s5, %s377
      $region52: #{simmim_forward.1} parent=47 // pred_fallthru
        _
    $region48: #{simmim_forward.1} parent=5 // pred_fallthru
      _
  $region6: #{simmim_forward.1} parent=0 // loop_footer
    %s15 = sadd.s32 1, %s11
  $region7: #{simmim_forward.1} parent=0 // loop_footer_branch
    %10 = sbr.rel target = $region3
  $region8: #{simmim_forward.1} parent=0 // loop_exit
    _

</llo_original>
